<compile_context>
chip_gen: v7x
topology: tpu7x:2x2x1
jax: 0.10.0
libtpu: 0.0.40
codegen_flags: <defaults>
</compile_context>

<pallas_src>
import jax
import jax.numpy as jnp
from jax.experimental import pallas as pl
from jax.experimental.pallas import tpu as pltpu

NB = 8        # number of b-values = input width (len(bvalues))
HID = 32      # hidden width (net_pars.width is 0 in the config -> pick a deterministic hidden size)
NENC = 4      # number of parallel encoders (fitS0=True -> est_pars = 4)
FUSED = NENC * HID          # 128: fused hidden width (exactly one vreg lane span)
AUXW = NB + 2 * NENC        # 16: [neg_bv(8) | bounds_min(4) | bounds_range(4)]
OUTW = NB + 2 * NENC        # 16: [sig(8) | params_unorm(4) | params_norm(4)]

# bounds: rows = [min, max], columns = [Dt, Fp, Dp, S0]   (static config)
BOUNDS_MIN = (0.0, 0.0, 0.005, 0.7)
BOUNDS_MAX = (0.005, 0.7, 0.3, 1.3)


def _elu(x):
    # nn.ELU with alpha=1.0; clamp the exp argument so the unselected branch never produces inf.
    return jnp.where(x > 0, x, jnp.exp(jnp.minimum(x, 0.0)) - 1.0)


def ivim_kernel(x_ref, aux_ref, w1_ref, b1_ref, w2_ref, b2_ref, wh_ref, bh_ref, out_ref):
    x = x_ref[...]                              # (TB, NB)
    aux = aux_ref[...]                          # (1, 16): [neg_bv | bmin | brange]
    neg_bv = aux[:, 0:NB]                       # (1, NB)
    bmin = aux[:, NB:NB + NENC]                 # (1, 4)
    brng = aux[:, NB + NENC:NB + 2 * NENC]      # (1, 4)

    # fused layer 1 (BatchNorm folded into W/b): (TB,8) @ (8,128)
    h = jnp.dot(x, w1_ref[...], preferred_element_type=jnp.float32) + b1_ref[...]
    h = _elu(h)
    # TODO(synk): nn.Dropout(0.1) is identity in eval mode; training-mode RNG dropout not implemented.

    # fused layer 2 (block-diagonal weights, BatchNorm folded): (TB,128) @ (128,128)
    h = jnp.dot(h, w2_ref[...], preferred_element_type=jnp.float32) + b2_ref[...]
    h = _elu(h)

    # fused heads: (TB,128) @ (128,4) -> columns [Dt, Fp, Dp, S0]
    p = jnp.dot(h, wh_ref[...], preferred_element_type=jnp.float32) + bh_ref[...]
    pn = jax.nn.sigmoid(p)                      # (TB, 4)  params_norm
    pu = bmin + pn * brng                       # (TB, 4)  params_unorm

    dt = pu[:, 0:1]
    fp = pu[:, 1:2]
    dp = pu[:, 2:3]
    s0 = pu[:, 3:4]
    # IVIM bi-exponential signal, broadcast (TB,1) x (1,NB) -> (TB,NB); exp runs on the EUP slot.
    sig = s0 * (fp * jnp.exp(neg_bv * dp) + (1.0 - fp) * jnp.exp(neg_bv * dt))

    # single lane-dense store: [sig(8) | pu(4) | pn(4)]
    out_ref[...] = jnp.concatenate([sig, pu, pn], axis=1)


def _fuse_params(params):
    """Fold eval-mode BatchNorm into the Linears and fuse the 4 encoders."""
    (w1, b1, s1, t1, w2, b2, s2, t2, wh, bh) = params
    # BN fold: y = (x@W + b)*s + t  ==  x@(W*s) + (b*s + t)
    w1f = w1 * s1                       # (NENC, NB, HID)
    b1f = b1 * s1 + t1                  # (NENC, 1, HID)
    w2f = w2 * s2                       # (NENC, HID, HID)
    b2f = b2 * s2 + t2                  # (NENC, 1, HID)

    # layer 1: concat along output dim -> (NB, 128)
    W1 = jnp.concatenate([w1f[e] for e in range(NENC)], axis=1)
    B1 = jnp.concatenate([b1f[e] for e in range(NENC)], axis=1)          # (1, 128)
    # layer 2: block-diagonal -> (128, 128)
    W2 = jnp.zeros((FUSED, FUSED), jnp.float32)
    for e in range(NENC):
        W2 = W2.at[e * HID:(e + 1) * HID, e * HID:(e + 1) * HID].set(w2f[e])
    B2 = jnp.concatenate([b2f[e] for e in range(NENC)], axis=1)          # (1, 128)
    # heads: block layout -> (128, 4); column order [Dt, Fp, Dp, S0]
    WH = jnp.zeros((FUSED, NENC), jnp.float32)
    for e in range(NENC):
        WH = WH.at[e * HID:(e + 1) * HID, e:e + 1].set(wh[e])
    BH = jnp.concatenate([bh[e] for e in range(NENC)], axis=1)           # (1, 4)
    return W1, B1, W2, B2, WH, BH


def _pick_tb(batch):
    """Large batch tile (amortize per-step overhead), >=2 grid steps when possible."""
    half = (batch // 2) // 8 * 8
    return max(8, min(1024, half))


def ivim_forward(x, bvalues, params, tb=None):
    B, nb = x.shape
    assert nb == NB
    x = x.astype(jnp.float32)
    if tb is None:
        tb = _pick_tb(B)
    n_tiles = pl.cdiv(B, tb)
    Bp = n_tiles * tb
    if Bp != B:
        x = jnp.pad(x, ((0, Bp - B), (0, 0)))

    W1, B1, W2, B2, WH, BH = _fuse_params(params)

    bv = jnp.asarray(bvalues, jnp.float32).reshape(1, NB)
    bmin = jnp.asarray(BOUNDS_MIN, jnp.float32).reshape(1, NENC)
    brng = (jnp.asarray(BOUNDS_MAX, jnp.float32)
            - jnp.asarray(BOUNDS_MIN, jnp.float32)).reshape(1, NENC)
    aux = jnp.concatenate([-bv, bmin, brng], axis=1)                     # (1, 16)

    def full2(shape):
        # weights / constants: same (full) block every grid step -> stays resident in VMEM
        return pl.BlockSpec(shape, lambda i: (0, 0))

    out = pl.pallas_call(
        ivim_kernel,
        out_shape=jax.ShapeDtypeStruct((Bp, OUTW), jnp.float32),
        grid_spec=pltpu.PrefetchScalarGridSpec(
            num_scalar_prefetch=0,
            grid=(n_tiles,),
            in_specs=[
                pl.BlockSpec((tb, NB), lambda i: (i, 0)),   # x batch tile
                full2((1, AUXW)),                           # constants
                full2(W1.shape), full2(B1.shape),
                full2(W2.shape), full2(B2.shape),
                full2(WH.shape), full2(BH.shape),
            ],
            out_specs=pl.BlockSpec((tb, OUTW), lambda i: (i, 0)),
        ),
        compiler_params=pltpu.CompilerParams(
            dimension_semantics=("parallel",)),
    )(x, aux, W1, B1, W2, B2, WH, BH)

    sig = out[:B, 0:NB]
    pu = out[:B, NB:NB + NENC]
    pn = out[:B, NB + NENC:NB + 2 * NENC]
    return sig, pu, pn


def init_params(key):
    ks = jax.random.split(key, 12)
    # Linear weights (deterministic, fan-in scaled)
    w1 = jax.random.normal(ks[0], (NENC, NB, HID), jnp.float32) / jnp.sqrt(NB)
    b1 = jax.random.normal(ks[1], (NENC, 1, HID), jnp.float32) * 0.01
    w2 = jax.random.normal(ks[2], (NENC, HID, HID), jnp.float32) / jnp.sqrt(HID)
    b2 = jax.random.normal(ks[3], (NENC, 1, HID), jnp.float32) * 0.01
    wh = jax.random.normal(ks[4], (NENC, HID, 1), jnp.float32) / jnp.sqrt(HID)
    bh = jax.random.normal(ks[5], (NENC, 1, 1), jnp.float32) * 0.01
    # BatchNorm1d (eval mode) params + running stats, folded to scale/shift
    eps = 1e-5

    def bn_fold(kg, kb, km, kv):
        gamma = 1.0 + 0.1 * jax.random.normal(kg, (NENC, 1, HID), jnp.float32)
        beta = 0.05 * jax.random.normal(kb, (NENC, 1, HID), jnp.float32)
        rmean = 0.05 * jax.random.normal(km, (NENC, 1, HID), jnp.float32)
        rvar = 1.0 + 0.1 * jax.random.uniform(kv, (NENC, 1, HID), jnp.float32)
        scale = gamma / jnp.sqrt(rvar + eps)
        shift = beta - rmean * scale
        return scale, shift

    s1, t1 = bn_fold(ks[6], ks[7], ks[8], ks[9])
    s2, t2 = bn_fold(ks[10], ks[11], ks[8], ks[9])
    return (w1, b1, s1, t1, w2, b2, s2, t2, wh, bh)


def reference_forward(x, bvalues, params):
    """Pure-JAX reference mirroring the PyTorch forward (eval mode), unfused."""
    (w1, b1, s1, t1, w2, b2, s2, t2, wh, bh) = params
    hi = jax.lax.Precision.HIGHEST
    bmin = jnp.asarray(BOUNDS_MIN)
    bmax = jnp.asarray(BOUNDS_MAX)
    norm = []
    for e in range(NENC):
        h = _elu((jnp.dot(x, w1[e], precision=hi) + b1[e]) * s1[e] + t1[e])
        h = _elu((jnp.dot(h, w2[e], precision=hi) + b2[e]) * s2[e] + t2[e])
        norm.append(jax.nn.sigmoid(jnp.dot(h, wh[e], precision=hi) + bh[e]))
    pn = jnp.concatenate(norm, axis=1)                       # (B,4)
    pu = bmin[None, :] + pn * (bmax - bmin)[None, :]         # (B,4)
    dt, fp, dp, s0 = (pu[:, 0:1], pu[:, 1:2], pu[:, 2:3], pu[:, 3:4])
    bv = bvalues.reshape(1, -1)
    sig = s0 * (fp * jnp.exp(-bv * dp) + (1.0 - fp) * jnp.exp(-bv * dt))
    return sig, pu, pn


if __name__ == "__main__":
    key = jax.random.PRNGKey(0)
    k_x, k_p = jax.random.split(key)

    B = 16
    bvalues = jnp.array([0., 5., 10., 50., 100., 300., 500., 1000.], jnp.float32)
    assert bvalues.shape[0] == NB
    x = 1.0 + 0.1 * jax.random.normal(k_x, (B, NB), jnp.float32)

    params = init_params(k_p)

    sig, pu, pn = ivim_forward(x, bvalues, params)
    jax.block_until_ready((sig, pu, pn))

    rsig, rpu, rpn = reference_forward(x, bvalues, params)
    assert jnp.allclose(sig, rsig, rtol=1e-3, atol=1e-4)
    assert jnp.allclose(pu, rpu, rtol=1e-3, atol=1e-4)
    assert jnp.allclose(pn, rpn, rtol=1e-3, atol=1e-4)

    print("KERNEL_OK")
</pallas_src>

<mosaic_0001>
module attributes {stable_mosaic.version = 11 : i64} {
  func.func @ivim_kernel(%arg0: i32, %arg1: memref<8x8xf32, #tpu.memory_space<vmem>>, %arg2: memref<1x16xf32, #tpu.memory_space<vmem>>, %arg3: memref<8x128xf32, #tpu.memory_space<vmem>>, %arg4: memref<1x128xf32, #tpu.memory_space<vmem>>, %arg5: memref<128x128xf32, #tpu.memory_space<vmem>>, %arg6: memref<1x128xf32, #tpu.memory_space<vmem>>, %arg7: memref<128x4xf32, #tpu.memory_space<vmem>>, %arg8: memref<1x4xf32, #tpu.memory_space<vmem>>, %arg9: memref<8x16xf32, #tpu.memory_space<vmem>>) attributes {dimension_semantics = [#tpu.dimension_semantics<parallel>], iteration_bounds = array<i64: 2>, scalar_prefetch = 0 : i64, scratch_operands = 0 : i64, tpu.core_type = #tpu.core_type<tc>, window_params = [{transform_indices = @transform_0, window_bounds = array<i64: 8, 8>}, {pipeline_mode = #tpu.pipeline_mode<synchronous>, transform_indices = @transform_1, window_bounds = array<i64: 1, 16>}, {pipeline_mode = #tpu.pipeline_mode<synchronous>, transform_indices = @transform_2, window_bounds = array<i64: 8, 128>}, {pipeline_mode = #tpu.pipeline_mode<synchronous>, transform_indices = @transform_3, window_bounds = array<i64: 1, 128>}, {pipeline_mode = #tpu.pipeline_mode<synchronous>, transform_indices = @transform_4, window_bounds = array<i64: 128, 128>}, {pipeline_mode = #tpu.pipeline_mode<synchronous>, transform_indices = @transform_5, window_bounds = array<i64: 1, 128>}, {pipeline_mode = #tpu.pipeline_mode<synchronous>, transform_indices = @transform_6, window_bounds = array<i64: 128, 4>}, {pipeline_mode = #tpu.pipeline_mode<synchronous>, transform_indices = @transform_7, window_bounds = array<i64: 1, 4>}, {transform_indices = @transform_8, window_bounds = array<i64: 8, 16>}]} {
    %c0 = arith.constant 0 : index
    %c0_0 = arith.constant 0 : index
    %0 = vector.load %arg1[%c0, %c0_0] : memref<8x8xf32, #tpu.memory_space<vmem>>, vector<8x8xf32>
    %c0_1 = arith.constant 0 : index
    %c0_2 = arith.constant 0 : index
    %1 = vector.load %arg2[%c0_1, %c0_2] : memref<1x16xf32, #tpu.memory_space<vmem>>, vector<1x16xf32>
    %2 = vector.extract_strided_slice %1 {offsets = [0, 0], sizes = [1, 8], strides = [1, 1]} : vector<1x16xf32> to vector<1x8xf32>
    %3 = vector.extract_strided_slice %1 {offsets = [0, 8], sizes = [1, 4], strides = [1, 1]} : vector<1x16xf32> to vector<1x4xf32>
    %4 = vector.extract_strided_slice %1 {offsets = [0, 12], sizes = [1, 4], strides = [1, 1]} : vector<1x16xf32> to vector<1x4xf32>
    %c0_3 = arith.constant 0 : index
    %c0_4 = arith.constant 0 : index
    %5 = vector.load %arg3[%c0_3, %c0_4] : memref<8x128xf32, #tpu.memory_space<vmem>>, vector<8x128xf32>
    %cst = arith.constant dense<0.000000e+00> : vector<8x128xf32>
    %6 = tpu.matmul %0, %5, %cst {dimension_numbers = #tpu.dot_dimension_numbers<[1], [0], [0], [1], [0, 0, 1, 1], [], []>} : vector<8x8xf32>, vector<8x128xf32>, vector<8x128xf32> -> vector<8x128xf32>
    %c0_5 = arith.constant 0 : index
    %c0_6 = arith.constant 0 : index
    %7 = vector.load %arg4[%c0_5, %c0_6] : memref<1x128xf32, #tpu.memory_space<vmem>>, vector<1x128xf32>
    %8 = vector.broadcast %7 : vector<1x128xf32> to vector<8x128xf32>
    %9 = arith.addf %6, %8 : vector<8x128xf32>
    %cst_7 = arith.constant 0.000000e+00 : f32
    %10 = vector.broadcast %cst_7 : f32 to vector<8x128xf32>
    %11 = arith.cmpf ogt, %9, %10 : vector<8x128xf32>
    %cst_8 = arith.constant 0.000000e+00 : f32
    %12 = vector.broadcast %cst_8 : f32 to vector<8x128xf32>
    %13 = arith.minimumf %9, %12 : vector<8x128xf32>
    %14 = math.exp %13 : vector<8x128xf32>
    %cst_9 = arith.constant 1.000000e+00 : f32
    %15 = vector.broadcast %cst_9 : f32 to vector<8x128xf32>
    %16 = arith.subf %14, %15 : vector<8x128xf32>
    %17 = arith.select %11, %9, %16 : vector<8x128xi1>, vector<8x128xf32>
    %c0_10 = arith.constant 0 : index
    %c0_11 = arith.constant 0 : index
    %18 = vector.load %arg5[%c0_10, %c0_11] : memref<128x128xf32, #tpu.memory_space<vmem>>, vector<128x128xf32>
    %cst_12 = arith.constant dense<0.000000e+00> : vector<8x128xf32>
    %19 = tpu.matmul %17, %18, %cst_12 {dimension_numbers = #tpu.dot_dimension_numbers<[1], [0], [0], [1], [0, 0, 1, 1], [], []>} : vector<8x128xf32>, vector<128x128xf32>, vector<8x128xf32> -> vector<8x128xf32>
    %c0_13 = arith.constant 0 : index
    %c0_14 = arith.constant 0 : index
    %20 = vector.load %arg6[%c0_13, %c0_14] : memref<1x128xf32, #tpu.memory_space<vmem>>, vector<1x128xf32>
    %21 = vector.broadcast %20 : vector<1x128xf32> to vector<8x128xf32>
    %22 = arith.addf %19, %21 : vector<8x128xf32>
    %cst_15 = arith.constant 0.000000e+00 : f32
    %23 = vector.broadcast %cst_15 : f32 to vector<8x128xf32>
    %24 = arith.cmpf ogt, %22, %23 : vector<8x128xf32>
    %cst_16 = arith.constant 0.000000e+00 : f32
    %25 = vector.broadcast %cst_16 : f32 to vector<8x128xf32>
    %26 = arith.minimumf %22, %25 : vector<8x128xf32>
    %27 = math.exp %26 : vector<8x128xf32>
    %cst_17 = arith.constant 1.000000e+00 : f32
    %28 = vector.broadcast %cst_17 : f32 to vector<8x128xf32>
    %29 = arith.subf %27, %28 : vector<8x128xf32>
    %30 = arith.select %24, %22, %29 : vector<8x128xi1>, vector<8x128xf32>
    %c0_18 = arith.constant 0 : index
    %c0_19 = arith.constant 0 : index
    %31 = vector.load %arg7[%c0_18, %c0_19] : memref<128x4xf32, #tpu.memory_space<vmem>>, vector<128x4xf32>
    %cst_20 = arith.constant dense<0.000000e+00> : vector<8x4xf32>
    %32 = tpu.matmul %30, %31, %cst_20 {dimension_numbers = #tpu.dot_dimension_numbers<[1], [0], [0], [1], [0, 0, 1, 1], [], []>} : vector<8x128xf32>, vector<128x4xf32>, vector<8x4xf32> -> vector<8x4xf32>
    %c0_21 = arith.constant 0 : index
    %c0_22 = arith.constant 0 : index
    %33 = vector.load %arg8[%c0_21, %c0_22] : memref<1x4xf32, #tpu.memory_space<vmem>>, vector<1x4xf32>
    %34 = vector.broadcast %33 : vector<1x4xf32> to vector<8x4xf32>
    %35 = arith.addf %32, %34 : vector<8x4xf32>
    %36 = arith.negf %35 : vector<8x4xf32>
    %37 = math.exp %36 : vector<8x4xf32>
    %cst_23 = arith.constant 1.000000e+00 : f32
    %38 = vector.broadcast %cst_23 : f32 to vector<8x4xf32>
    %39 = arith.addf %38, %37 : vector<8x4xf32>
    %40 = arith.divf %38, %39 : vector<8x4xf32>
    %41 = vector.broadcast %4 : vector<1x4xf32> to vector<8x4xf32>
    %42 = arith.mulf %40, %41 : vector<8x4xf32>
    %43 = vector.broadcast %3 : vector<1x4xf32> to vector<8x4xf32>
    %44 = arith.addf %43, %42 : vector<8x4xf32>
    %45 = vector.extract_strided_slice %44 {offsets = [0, 0], sizes = [8, 1], strides = [1, 1]} : vector<8x4xf32> to vector<8x1xf32>
    %46 = vector.extract_strided_slice %44 {offsets = [0, 1], sizes = [8, 1], strides = [1, 1]} : vector<8x4xf32> to vector<8x1xf32>
    %47 = vector.extract_strided_slice %44 {offsets = [0, 2], sizes = [8, 1], strides = [1, 1]} : vector<8x4xf32> to vector<8x1xf32>
    %48 = vector.extract_strided_slice %44 {offsets = [0, 3], sizes = [8, 1], strides = [1, 1]} : vector<8x4xf32> to vector<8x1xf32>
    %49 = vector.broadcast %2 : vector<1x8xf32> to vector<8x8xf32>
    %50 = vector.broadcast %47 : vector<8x1xf32> to vector<8x8xf32>
    %51 = arith.mulf %49, %50 : vector<8x8xf32>
    %52 = math.exp %51 : vector<8x8xf32>
    %53 = vector.broadcast %46 : vector<8x1xf32> to vector<8x8xf32>
    %54 = arith.mulf %53, %52 : vector<8x8xf32>
    %cst_24 = arith.constant 1.000000e+00 : f32
    %55 = vector.broadcast %cst_24 : f32 to vector<8x1xf32>
    %56 = arith.subf %55, %46 : vector<8x1xf32>
    %57 = vector.broadcast %2 : vector<1x8xf32> to vector<8x8xf32>
    %58 = vector.broadcast %45 : vector<8x1xf32> to vector<8x8xf32>
    %59 = arith.mulf %57, %58 : vector<8x8xf32>
    %60 = math.exp %59 : vector<8x8xf32>
    %61 = vector.broadcast %56 : vector<8x1xf32> to vector<8x8xf32>
    %62 = arith.mulf %61, %60 : vector<8x8xf32>
    %63 = arith.addf %54, %62 : vector<8x8xf32>
    %64 = vector.broadcast %48 : vector<8x1xf32> to vector<8x8xf32>
    %65 = arith.mulf %64, %63 : vector<8x8xf32>
    %66 = tpu.concatenate %65, %44, %40 in 1 : vector<8x8xf32>, vector<8x4xf32>, vector<8x4xf32> -> vector<8x16xf32>
    %c0_25 = arith.constant 0 : index
    %c0_26 = arith.constant 0 : index
    %67 = vector.load %arg9[%c0_25, %c0_26] : memref<8x16xf32, #tpu.memory_space<vmem>>, vector<8x16xf32>
    tpu.vector_store %arg9[%c0_25, %c0_26], %66 {strides = array<i32>} : memref<8x16xf32, #tpu.memory_space<vmem>>, vector<8x16xf32>,
    return
  }
  func.func @transform_0(%arg0: i32) -> (i32, i32) {
    %c0_i32 = arith.constant 0 : i32
    %c0_i32_0 = arith.constant 0 : i32
    return %arg0, %c0_i32 : i32, i32
  }
  func.func @transform_1(%arg0: i32) -> (i32, i32) {
    %c0_i32 = arith.constant 0 : i32
    %c0_i32_0 = arith.constant 0 : i32
    %c0_i32_1 = arith.constant 0 : i32
    return %c0_i32, %c0_i32_0 : i32, i32
  }
  func.func @transform_2(%arg0: i32) -> (i32, i32) {
    %c0_i32 = arith.constant 0 : i32
    %c0_i32_0 = arith.constant 0 : i32
    %c0_i32_1 = arith.constant 0 : i32
    return %c0_i32, %c0_i32_0 : i32, i32
  }
  func.func @transform_3(%arg0: i32) -> (i32, i32) {
    %c0_i32 = arith.constant 0 : i32
    %c0_i32_0 = arith.constant 0 : i32
    %c0_i32_1 = arith.constant 0 : i32
    return %c0_i32, %c0_i32_0 : i32, i32
  }
  func.func @transform_4(%arg0: i32) -> (i32, i32) {
    %c0_i32 = arith.constant 0 : i32
    %c0_i32_0 = arith.constant 0 : i32
    %c0_i32_1 = arith.constant 0 : i32
    return %c0_i32, %c0_i32_0 : i32, i32
  }
  func.func @transform_5(%arg0: i32) -> (i32, i32) {
    %c0_i32 = arith.constant 0 : i32
    %c0_i32_0 = arith.constant 0 : i32
    %c0_i32_1 = arith.constant 0 : i32
    return %c0_i32, %c0_i32_0 : i32, i32
  }
  func.func @transform_6(%arg0: i32) -> (i32, i32) {
    %c0_i32 = arith.constant 0 : i32
    %c0_i32_0 = arith.constant 0 : i32
    %c0_i32_1 = arith.constant 0 : i32
    return %c0_i32, %c0_i32_0 : i32, i32
  }
  func.func @transform_7(%arg0: i32) -> (i32, i32) {
    %c0_i32 = arith.constant 0 : i32
    %c0_i32_0 = arith.constant 0 : i32
    %c0_i32_1 = arith.constant 0 : i32
    return %c0_i32, %c0_i32_0 : i32, i32
  }
  func.func @transform_8(%arg0: i32) -> (i32, i32) {
    %c0_i32 = arith.constant 0 : i32
    %c0_i32_0 = arith.constant 0 : i32
    return %arg0, %c0_i32 : i32, i32
  }
}

</mosaic_0001>

<llo_original>
// kernel: tpu_custom_call.1
$region0: #{tpu_custom_call.1}
  #allocation0 [shape = 'u32[]', space=smem, size = 0x4, offset = 0x4, fixed_abs, tag = 'smem constant byte address 0x4 - core index']
  #allocation1 [shape = 'u32[144,128]{1,0:T(1,128)}', space=vmem, size = 0x12000, scoped, tag = 'internal scratch']
  %s0 = inlined_call_operand.vmem [shape: f32[16,8], index: 0, kind: input, shape index: {}]
  %s1 = inlined_call_operand.vmem [shape: f32[1,16], index: 1, kind: input, shape index: {}]
  %s2 = inlined_call_operand.vmem [shape: f32[8,128], index: 2, kind: input, shape index: {}]
  %s3 = inlined_call_operand.vmem [shape: f32[1,128], index: 3, kind: input, shape index: {}]
  %s4 = inlined_call_operand.vmem [shape: f32[128,128], index: 4, kind: input, shape index: {}]
  %s5 = inlined_call_operand.vmem [shape: f32[1,128], index: 5, kind: input, shape index: {}]
  %s6 = inlined_call_operand.vmem [shape: f32[128,4], index: 6, kind: input, shape index: {}]
  %s7 = inlined_call_operand.vmem [shape: f32[1,4], index: 7, kind: input, shape index: {}]
  %s8 = inlined_call_operand.hbm [shape: f32[16,16], index: 8, kind: output, shape index: {}]
  %s9 = sld [smem:[#allocation0]]
  $region65: #{tpu_custom_call.1} parent=0
    _
  %s11 = ssub.s32 1, %s9
  %s12 = scalar_select 0, %s11, %s9
  $region1: #{tpu_custom_call.1} parent=0
    #allocation2 [shape = 'u8[8192]{0}', space=vmem, size = 0x2000, scoped, tag = 'output window, operand 0']
    #allocation3 [shape = 's32[2]{0}', space=sflag, size = 0x8, scoped, tag = 'scoped memory for tpu_custom_call.1']
    %13 = vsyncpa [#allocation3], 0
    %s14 = scalar_lea.sflag [#allocation3], 1
    %15 = vsyncpa %s14, 0
    loop: start=0, step=1, limit=4
    $region2: #{tpu_custom_call.1} parent=1 // loop_pre_header
      _
    $region3: #{tpu_custom_call.1} parent=1 // loop_header
      %s17 = sphi 0, %s21
      %p18 = scmp.ge.s32.totalorder %s17, 4
      %s27 = sphi 0, %s29
      %s30 = sphi 0, %s27
      %s31 = sphi 0, %s30
      %s47 = sphi 0, %s31
      %s51 = sphi 0, %s51
      %s53 = sphi 0, %s51
      %s54 = sphi 0, %s53
      %s68 = sphi 0, %s54
      %s72 = sphi 0, %s72
      %s74 = sphi 0, %s72
      %s75 = sphi 0, %s74
      %s89 = sphi 0, %s75
      %s93 = sphi 0, %s93
      %s95 = sphi 0, %s93
      %s96 = sphi 0, %s95
      %s110 = sphi 0, %s96
      %s114 = sphi 0, %s114
      %s116 = sphi 0, %s114
      %s117 = sphi 0, %s116
      %s131 = sphi 0, %s117
      %s135 = sphi 0, %s135
      %s137 = sphi 0, %s135
      %s138 = sphi 0, %s137
      %s152 = sphi 0, %s138
      %s156 = sphi 0, %s156
      %s158 = sphi 0, %s156
      %s159 = sphi 0, %s158
      %s173 = sphi 0, %s159
      %s177 = sphi 0, %s177
      %s179 = sphi 0, %s177
      %s180 = sphi 0, %s179
      %s194 = sphi 0, %s180
      %s200 = sphi 0, %s202
      %s203 = sphi 0, %s200
      %s204 = sphi 0, %s203
      %s220 = sphi 0, %s204
    $region4: #{tpu_custom_call.1} parent=1 // loop_header_branch
      %20 = sbr.rel (%p18) target = $region8
    $region5: #{tpu_custom_call.1} parent=1 // loop_body
      %s22 = ssub.s32 %s17, 1
      %s23 = ssub.s32 %s17, 2
      %s24 = sadd.s32 %s17, 1
      %s25 = ssub.s32 %s17, %s24
      %p26 = scmp.eq.s32.totalorder %s25, 0
      %s28 = sadd.s32 %s27, 1
      %s29 = scalar_select %p26, %s27, %s28
      %p32 = pneg %p26
      %p33 = scmp.eq.s32.totalorder %s17, 1
      %p34 = por %p32, %p33
      %p35 = scmp.ne.s32.totalorder %s27, %s30
      %p36 = scmp.eq.s32.totalorder %s17, 0
      %p37 = por %p35, %p36
      %p38 = scmp.ne.s32.totalorder %s27, %s30
      %p39 = scmp.eq.s32.totalorder %s22, 1
      %p40 = por %p38, %p39
      %p41 = scmp.ne.s32.totalorder %s30, %s31
      %p42 = scmp.eq.s32.totalorder %s22, 0
      %p43 = por %p41, %p42
      %p44 = scmp.ne.s32.totalorder %s30, %s31
      %p45 = scmp.eq.s32.totalorder %s23, 1
      %p46 = por %p44, %p45
      %p48 = scmp.ne.s32.totalorder %s31, %s47
      %p49 = scmp.eq.s32.totalorder %s23, 0
      %p50 = por %p48, %p49
      %s52 = sadd.s32 %s51, 1
      %p55 = scmp.eq.s32.totalorder %s17, 1
      %p56 = scmp.ne.s32.totalorder %s51, %s53
      %p57 = scmp.eq.s32.totalorder %s17, 0
      %p58 = por %p56, %p57
      %p59 = scmp.ne.s32.totalorder %s51, %s53
      %p60 = scmp.eq.s32.totalorder %s22, 1
      %p61 = por %p59, %p60
      %p62 = scmp.ne.s32.totalorder %s53, %s54
      %p63 = scmp.eq.s32.totalorder %s22, 0
      %p64 = por %p62, %p63
      %p65 = scmp.ne.s32.totalorder %s53, %s54
      %p66 = scmp.eq.s32.totalorder %s23, 1
      %p67 = por %p65, %p66
      %p69 = scmp.ne.s32.totalorder %s54, %s68
      %p70 = scmp.eq.s32.totalorder %s23, 0
      %p71 = por %p69, %p70
      %s73 = sadd.s32 %s72, 1
      %p76 = scmp.eq.s32.totalorder %s17, 1
      %p77 = scmp.ne.s32.totalorder %s72, %s74
      %p78 = scmp.eq.s32.totalorder %s17, 0
      %p79 = por %p77, %p78
      %p80 = scmp.ne.s32.totalorder %s72, %s74
      %p81 = scmp.eq.s32.totalorder %s22, 1
      %p82 = por %p80, %p81
      %p83 = scmp.ne.s32.totalorder %s74, %s75
      %p84 = scmp.eq.s32.totalorder %s22, 0
      %p85 = por %p83, %p84
      %p86 = scmp.ne.s32.totalorder %s74, %s75
      %p87 = scmp.eq.s32.totalorder %s23, 1
      %p88 = por %p86, %p87
      %p90 = scmp.ne.s32.totalorder %s75, %s89
      %p91 = scmp.eq.s32.totalorder %s23, 0
      %p92 = por %p90, %p91
      %s94 = sadd.s32 %s93, 1
      %p97 = scmp.eq.s32.totalorder %s17, 1
      %p98 = scmp.ne.s32.totalorder %s93, %s95
      %p99 = scmp.eq.s32.totalorder %s17, 0
      %p100 = por %p98, %p99
      %p101 = scmp.ne.s32.totalorder %s93, %s95
      %p102 = scmp.eq.s32.totalorder %s22, 1
      %p103 = por %p101, %p102
      %p104 = scmp.ne.s32.totalorder %s95, %s96
      %p105 = scmp.eq.s32.totalorder %s22, 0
      %p106 = por %p104, %p105
      %p107 = scmp.ne.s32.totalorder %s95, %s96
      %p108 = scmp.eq.s32.totalorder %s23, 1
      %p109 = por %p107, %p108
      %p111 = scmp.ne.s32.totalorder %s96, %s110
      %p112 = scmp.eq.s32.totalorder %s23, 0
      %p113 = por %p111, %p112
      %s115 = sadd.s32 %s114, 1
      %p118 = scmp.eq.s32.totalorder %s17, 1
      %p119 = scmp.ne.s32.totalorder %s114, %s116
      %p120 = scmp.eq.s32.totalorder %s17, 0
      %p121 = por %p119, %p120
      %p122 = scmp.ne.s32.totalorder %s114, %s116
      %p123 = scmp.eq.s32.totalorder %s22, 1
      %p124 = por %p122, %p123
      %p125 = scmp.ne.s32.totalorder %s116, %s117
      %p126 = scmp.eq.s32.totalorder %s22, 0
      %p127 = por %p125, %p126
      %p128 = scmp.ne.s32.totalorder %s116, %s117
      %p129 = scmp.eq.s32.totalorder %s23, 1
      %p130 = por %p128, %p129
      %p132 = scmp.ne.s32.totalorder %s117, %s131
      %p133 = scmp.eq.s32.totalorder %s23, 0
      %p134 = por %p132, %p133
      %s136 = sadd.s32 %s135, 1
      %p139 = scmp.eq.s32.totalorder %s17, 1
      %p140 = scmp.ne.s32.totalorder %s135, %s137
      %p141 = scmp.eq.s32.totalorder %s17, 0
      %p142 = por %p140, %p141
      %p143 = scmp.ne.s32.totalorder %s135, %s137
      %p144 = scmp.eq.s32.totalorder %s22, 1
      %p145 = por %p143, %p144
      %p146 = scmp.ne.s32.totalorder %s137, %s138
      %p147 = scmp.eq.s32.totalorder %s22, 0
      %p148 = por %p146, %p147
      %p149 = scmp.ne.s32.totalorder %s137, %s138
      %p150 = scmp.eq.s32.totalorder %s23, 1
      %p151 = por %p149, %p150
      %p153 = scmp.ne.s32.totalorder %s138, %s152
      %p154 = scmp.eq.s32.totalorder %s23, 0
      %p155 = por %p153, %p154
      %s157 = sadd.s32 %s156, 1
      %p160 = scmp.eq.s32.totalorder %s17, 1
      %p161 = scmp.ne.s32.totalorder %s156, %s158
      %p162 = scmp.eq.s32.totalorder %s17, 0
      %p163 = por %p161, %p162
      %p164 = scmp.ne.s32.totalorder %s156, %s158
      %p165 = scmp.eq.s32.totalorder %s22, 1
      %p166 = por %p164, %p165
      %p167 = scmp.ne.s32.totalorder %s158, %s159
      %p168 = scmp.eq.s32.totalorder %s22, 0
      %p169 = por %p167, %p168
      %p170 = scmp.ne.s32.totalorder %s158, %s159
      %p171 = scmp.eq.s32.totalorder %s23, 1
      %p172 = por %p170, %p171
      %p174 = scmp.ne.s32.totalorder %s159, %s173
      %p175 = scmp.eq.s32.totalorder %s23, 0
      %p176 = por %p174, %p175
      %s178 = sadd.s32 %s177, 1
      %p181 = scmp.eq.s32.totalorder %s17, 1
      %p182 = scmp.ne.s32.totalorder %s177, %s179
      %p183 = scmp.eq.s32.totalorder %s17, 0
      %p184 = por %p182, %p183
      %p185 = scmp.ne.s32.totalorder %s177, %s179
      %p186 = scmp.eq.s32.totalorder %s22, 1
      %p187 = por %p185, %p186
      %p188 = scmp.ne.s32.totalorder %s179, %s180
      %p189 = scmp.eq.s32.totalorder %s22, 0
      %p190 = por %p188, %p189
      %p191 = scmp.ne.s32.totalorder %s179, %s180
      %p192 = scmp.eq.s32.totalorder %s23, 1
      %p193 = por %p191, %p192
      %p195 = scmp.ne.s32.totalorder %s180, %s194
      %p196 = scmp.eq.s32.totalorder %s23, 0
      %p197 = por %p195, %p196
      %s198 = ssub.s32 %s17, %s24
      %p199 = scmp.eq.s32.totalorder %s198, 0
      %s201 = sadd.s32 %s200, 1
      %s202 = scalar_select %p199, %s200, %s201
      %p205 = pneg %p199
      %p206 = scmp.eq.s32.totalorder %s17, 1
      %p207 = por %p205, %p206
      %p208 = scmp.ne.s32.totalorder %s200, %s203
      %p209 = scmp.eq.s32.totalorder %s17, 0
      %p210 = por %p208, %p209
      %p211 = scmp.ne.s32.totalorder %s200, %s203
      %p212 = scmp.eq.s32.totalorder %s22, 1
      %p213 = por %p211, %p212
      %p214 = scmp.ne.s32.totalorder %s203, %s204
      %p215 = scmp.eq.s32.totalorder %s22, 0
      %p216 = por %p214, %p215
      %p217 = scmp.ne.s32.totalorder %s203, %s204
      %p218 = scmp.eq.s32.totalorder %s23, 1
      %p219 = por %p217, %p218
      %p221 = scmp.ne.s32.totalorder %s204, %s220
      %p222 = scmp.eq.s32.totalorder %s23, 0
      %p223 = por %p221, %p222
      %p224 = scmp.le.s32.totalorder 1, %s17
      %p225 = scmp.lt.s32.totalorder %s17, 3
      %p226 = pnand %p224, %p225
      %p227 = pneg %p226
      // Predicated region
      $region9: #{tpu_custom_call.1} parent=5 // pred_check
        _
      $region10: #{tpu_custom_call.1} parent=5 // pred_check_branch
        %229 = sbr.rel (%p226) target = $region12
      $region11: #{tpu_custom_call.1} parent=5 // pred_region
        %s230 = ssub.s32 %s17, 1
        // Predicated region
        $region13: #{tpu_custom_call.1} parent=11 // pred_check
          %p231 = pneg %p64
        $region14: #{tpu_custom_call.1} parent=11 // pred_check_branch
          %233 = sbr.rel (%p231) target = $region16
        $region15: #{tpu_custom_call.1} parent=11 // pred_region
          _
        $region16: #{tpu_custom_call.1} parent=11 // pred_fallthru
          _
        // Predicated region
        $region17: #{tpu_custom_call.1} parent=11 // pred_check
          %p234 = pneg %p85
        $region18: #{tpu_custom_call.1} parent=11 // pred_check_branch
          %236 = sbr.rel (%p234) target = $region20
        $region19: #{tpu_custom_call.1} parent=11 // pred_region
          _
        $region20: #{tpu_custom_call.1} parent=11 // pred_fallthru
          _
        // Predicated region
        $region21: #{tpu_custom_call.1} parent=11 // pred_check
          %p237 = pneg %p106
        $region22: #{tpu_custom_call.1} parent=11 // pred_check_branch
          %239 = sbr.rel (%p237) target = $region24
        $region23: #{tpu_custom_call.1} parent=11 // pred_region
          _
        $region24: #{tpu_custom_call.1} parent=11 // pred_fallthru
          _
        // Predicated region
        $region25: #{tpu_custom_call.1} parent=11 // pred_check
          %p240 = pneg %p127
        $region26: #{tpu_custom_call.1} parent=11 // pred_check_branch
          %242 = sbr.rel (%p240) target = $region28
        $region27: #{tpu_custom_call.1} parent=11 // pred_region
          _
        $region28: #{tpu_custom_call.1} parent=11 // pred_fallthru
          _
        // Predicated region
        $region29: #{tpu_custom_call.1} parent=11 // pred_check
          %p243 = pneg %p148
        $region30: #{tpu_custom_call.1} parent=11 // pred_check_branch
          %245 = sbr.rel (%p243) target = $region32
        $region31: #{tpu_custom_call.1} parent=11 // pred_region
          _
        $region32: #{tpu_custom_call.1} parent=11 // pred_fallthru
          _
        // Predicated region
        $region33: #{tpu_custom_call.1} parent=11 // pred_check
          %p246 = pneg %p169
        $region34: #{tpu_custom_call.1} parent=11 // pred_check_branch
          %248 = sbr.rel (%p246) target = $region36
        $region35: #{tpu_custom_call.1} parent=11 // pred_region
          _
        $region36: #{tpu_custom_call.1} parent=11 // pred_fallthru
          _
        // Predicated region
        $region37: #{tpu_custom_call.1} parent=11 // pred_check
          %p249 = pneg %p190
        $region38: #{tpu_custom_call.1} parent=11 // pred_check_branch
          %251 = sbr.rel (%p249) target = $region40
        $region39: #{tpu_custom_call.1} parent=11 // pred_region
          _
        $region40: #{tpu_custom_call.1} parent=11 // pred_fallthru
          _
      $region12: #{tpu_custom_call.1} parent=5 // pred_fallthru
        _
      %p252 = scmp.lt.s32.totalorder %s17, 2
      // Predicated region
      $region41: #{tpu_custom_call.1} parent=5 // pred_check
        %p253 = pneg %p252
      $region42: #{tpu_custom_call.1} parent=5 // pred_check_branch
        %255 = sbr.rel (%p253) target = $region44
      $region43: #{tpu_custom_call.1} parent=5 // pred_region
        // Predicated region
        $region45: #{tpu_custom_call.1} parent=43 // pred_check
          %p256 = pneg %p37
        $region46: #{tpu_custom_call.1} parent=43 // pred_check_branch
          %258 = sbr.rel (%p256) target = $region48
        $region47: #{tpu_custom_call.1} parent=43 // pred_region
          %p259 = scmp.lt.s32.totalorder %s17, 1
          %s260 = scalar_select %p259, %s17, 1
          %s261 = smul.addr %s260, 8
          %s262 = scalar_lea.vmem %s0, %s261
        $region48: #{tpu_custom_call.1} parent=43 // pred_fallthru
          _
      $region44: #{tpu_custom_call.1} parent=5 // pred_fallthru
        _
      %p263 = scmp.le.s32.totalorder 1, %s17
      %p264 = scmp.lt.s32.totalorder %s17, 3
      %p265 = pnand %p263, %p264
      %p266 = pneg %p265
      // Predicated region
      $region49: #{tpu_custom_call.1} parent=5 // pred_check
        _
      $region50: #{tpu_custom_call.1} parent=5 // pred_check_branch
        %268 = sbr.rel (%p265) target = $region52
      $region51: #{tpu_custom_call.1} parent=5 // pred_region
        %s269 = ssub.s32 %s17, 1
        %p270 = scmp.lt.s32.totalorder %s22, 1
        %s271 = scalar_select %p270, %s22, 1
        %s272 = smul.addr %s271, 8
        %s273 = scalar_lea.vmem %s0, %s272
        %p274 = pneg %p43
        %p275 = pneg %p40
        %p276 = pneg %p64
        %p277 = pneg %p61
        %p278 = pneg %p85
        %p279 = pneg %p82
        %p280 = pneg %p106
        %p281 = pneg %p103
        %p282 = pneg %p127
        %p283 = pneg %p124
        %p284 = pneg %p148
        %p285 = pneg %p145
        %p286 = pneg %p169
        %p287 = pneg %p166
        %p288 = pneg %p190
        %p289 = pneg %p187
        %p290 = pneg %p216
        %p291 = pneg %p213
        %s292 = sand.u32 %s203, 1
        %s293 = scalar_lea.sflag [#allocation3], %s292
        %s294 = sand.u32 %s203, 1
        %s295 = smul.addr %s294, 8
        %s296 = scalar_lea.vmem [#allocation2], %s295
        %p297 = scmp.lt.s32.totalorder %s22, 1
        %s298 = scalar_select %p297, %s22, 1
        %s299 = smul.addr %s298, 8
        %s300 = scalar_lea.vmem %s0, %s299
        %v301 = vld [vmem:[%s300] sm:$0xff]
        %v302 = vld [vmem:[%s1] sm:$0x1]
        %v303 = vld [vmem:[%s2] sm:$0xff]
        %v304 = vld [vmem:[%s3] sm:$0x1]
        %v306 = vlaneseq
        %v307 = vshrl.u32 %v306, 7
        %v308 = vsub.s32 0, %v307
        %v309 = vrot.slane %v304, %v308
        %vm311 = vcmask 64512
        %v313 = vsel %vm311, %v301, 0
        %315 = vmatprep.subr.mxu0 0.0
        %316 = vmatpush1.msra.mxu0 %v303
        %317 = vmatprep.subr.mxu0 0.0
        %318 = vmatpush1.msra.mxu0 0.0
        %319 = vmatprep.subr.mxu0 0.0
        %320 = vmatpush1.msra.mxu0 0.0
        %321 = vmatprep.subr.mxu0 0.0
        %322 = vmatpush1.msra.mxu0 0.0
        %323 = vmatprep.subr.mxu0 0.0
        %324 = vmatpush1.msra.mxu0 0.0
        %325 = vmatprep.subr.mxu0 0.0
        %326 = vmatpush1.msra.mxu0 0.0
        %327 = vmatprep.subr.mxu0 0.0
        %328 = vmatpush1.msra.mxu0 0.0
        %329 = vmatprep.subr.mxu0 0.0
        %330 = vmatpush1.msra.mxu0 0.0
        %331 = vmatprep.subr.mxu0 0.0
        %332 = vmatpush1.msra.mxu0 0.0
        %333 = vmatprep.subr.mxu0 0.0
        %334 = vmatpush1.msra.mxu0 0.0
        %335 = vmatprep.subr.mxu0 0.0
        %336 = vmatpush1.msra.mxu0 0.0
        %337 = vmatprep.subr.mxu0 0.0
        %338 = vmatpush1.msra.mxu0 0.0
        %339 = vmatprep.subr.mxu0 0.0
        %340 = vmatpush1.msra.mxu0 0.0
        %341 = vmatprep.subr.mxu0 0.0
        %342 = vmatpush1.msra.mxu0 0.0
        %343 = vmatprep.subr.mxu0 0.0
        %344 = vmatpush1.msra.mxu0 0.0
        %345 = vmatprep.subr.mxu0 0.0
        %346 = vmatpush1.msra.mxu0 0.0
        %347 = vmatprep.subr.mxu0 0.0
        %348 = vmatpush1.msra.mxu0 0.0
        %349 = vmatprep.subr.mxu0 0.0
        %350 = vmatpush1.msra.mxu0 0.0
        %351 = vmatprep.subr.mxu0 0.0
        %352 = vmatpush1.msra.mxu0 0.0
        %353 = vmatprep.subr.mxu0 0.0
        %354 = vmatpush1.msra.mxu0 0.0
        %355 = vmatprep.subr.mxu0 0.0
        %356 = vmatpush1.msra.mxu0 0.0
        %357 = vmatprep.subr.mxu0 0.0
        %358 = vmatpush1.msra.mxu0 0.0
        %359 = vmatprep.subr.mxu0 0.0
        %360 = vmatpush1.msra.mxu0 0.0
        %361 = vmatprep.subr.mxu0 0.0
        %362 = vmatpush1.msra.mxu0 0.0
        %363 = vmatprep.subr.mxu0 0.0
        %364 = vmatpush1.msra.mxu0 0.0
        %365 = vmatprep.subr.mxu0 0.0
        %366 = vmatpush1.msra.mxu0 0.0
        %367 = vmatprep.subr.mxu0 0.0
        %368 = vmatpush1.msra.mxu0 0.0
        %369 = vmatprep.subr.mxu0 0.0
        %370 = vmatpush1.msra.mxu0 0.0
        %371 = vmatprep.subr.mxu0 0.0
        %372 = vmatpush1.msra.mxu0 0.0
        %373 = vmatprep.subr.mxu0 0.0
        %374 = vmatpush1.msra.mxu0 0.0
        %375 = vmatprep.subr.mxu0 0.0
        %376 = vmatpush1.msra.mxu0 0.0
        %377 = vmatprep.subr.mxu0 0.0
        %378 = vmatpush1.msra.mxu0 0.0
        %379 = vmatprep.mubr.f32.mxu0 0.0
        %380 = vmatmul.mubr.f32.gmra.mrb[0].mxu0 %v313
        %v381 = vpop.f32.mrb[0].mxu0
        %v382 = vadd.f32 %v309, %v381
        %v383 = vpop.f32.mrb[0].mxu0
        %384 = vdwg.mxu0
        %vm385 = vcmp.gt.f32.partialorder %v382, 0.0
        %v386 = vmin.f32 %v382, 0.0
        %v387 = vmul.f32 %v386, 1.442695
        %v388 = vpow.pop %v387
        %v389 = vsub.f32 %v388, 1.0
        %v390 = vsel %vm385, %v382, %v389
        %v391 = vld [vmem:[%s4] sm:$0xff]
        %v392 = vld [vmem:[%s4 + $0x8] sm:$0xff]
        %v393 = vld [vmem:[%s4 + $0x10] sm:$0xff]
        %v394 = vld [vmem:[%s4 + $0x18] sm:$0xff]
        %v395 = vld [vmem:[%s4 + $0x20] sm:$0xff]
        %v396 = vld [vmem:[%s4 + $0x28] sm:$0xff]
        %v397 = vld [vmem:[%s4 + $0x30] sm:$0xff]
        %v398 = vld [vmem:[%s4 + $0x38] sm:$0xff]
        %v399 = vld [vmem:[%s4 + $0x40] sm:$0xff]
        %v400 = vld [vmem:[%s4 + $0x48] sm:$0xff]
        %v401 = vld [vmem:[%s4 + $0x50] sm:$0xff]
        %v402 = vld [vmem:[%s4 + $0x58] sm:$0xff]
        %v403 = vld [vmem:[%s4 + $0x60] sm:$0xff]
        %v404 = vld [vmem:[%s4 + $0x68] sm:$0xff]
        %v405 = vld [vmem:[%s4 + $0x70] sm:$0xff]
        %v406 = vld [vmem:[%s4 + $0x78] sm:$0xff]
        %v407 = vld [vmem:[%s5] sm:$0x1]
        %v409 = vlaneseq
        %v410 = vshrl.u32 %v409, 7
        %v411 = vsub.s32 0, %v410
        %v412 = vrot.slane %v407, %v411
        %414 = vmatprep.subr.mxu0 0.0
        %415 = vmatpush1.msra.mxu0 %v391
        %416 = vmatprep.subr.mxu0 0.0
        %417 = vmatpush1.msra.mxu0 %v392
        %418 = vmatprep.subr.mxu0 0.0
        %419 = vmatpush1.msra.mxu0 %v393
        %420 = vmatprep.subr.mxu0 0.0
        %421 = vmatpush1.msra.mxu0 %v394
        %422 = vmatprep.subr.mxu0 0.0
        %423 = vmatpush1.msra.mxu0 %v395
        %424 = vmatprep.subr.mxu0 0.0
        %425 = vmatpush1.msra.mxu0 %v396
        %426 = vmatprep.subr.mxu0 0.0
        %427 = vmatpush1.msra.mxu0 %v397
        %428 = vmatprep.subr.mxu0 0.0
        %429 = vmatpush1.msra.mxu0 %v398
        %430 = vmatprep.subr.mxu0 0.0
        %431 = vmatpush1.msra.mxu0 %v399
        %432 = vmatprep.subr.mxu0 0.0
        %433 = vmatpush1.msra.mxu0 %v400
        %434 = vmatprep.subr.mxu0 0.0
        %435 = vmatpush1.msra.mxu0 %v401
        %436 = vmatprep.subr.mxu0 0.0
        %437 = vmatpush1.msra.mxu0 %v402
        %438 = vmatprep.subr.mxu0 0.0
        %439 = vmatpush1.msra.mxu0 %v403
        %440 = vmatprep.subr.mxu0 0.0
        %441 = vmatpush1.msra.mxu0 %v404
        %442 = vmatprep.subr.mxu0 0.0
        %443 = vmatpush1.msra.mxu0 %v405
        %444 = vmatprep.subr.mxu0 0.0
        %445 = vmatpush1.msra.mxu0 %v406
        %446 = vmatprep.subr.mxu0 0.0
        %447 = vmatpush1.msra.mxu0 0.0
        %448 = vmatprep.subr.mxu0 0.0
        %449 = vmatpush1.msra.mxu0 0.0
        %450 = vmatprep.subr.mxu0 0.0
        %451 = vmatpush1.msra.mxu0 0.0
        %452 = vmatprep.subr.mxu0 0.0
        %453 = vmatpush1.msra.mxu0 0.0
        %454 = vmatprep.subr.mxu0 0.0
        %455 = vmatpush1.msra.mxu0 0.0
        %456 = vmatprep.subr.mxu0 0.0
        %457 = vmatpush1.msra.mxu0 0.0
        %458 = vmatprep.subr.mxu0 0.0
        %459 = vmatpush1.msra.mxu0 0.0
        %460 = vmatprep.subr.mxu0 0.0
        %461 = vmatpush1.msra.mxu0 0.0
        %462 = vmatprep.subr.mxu0 0.0
        %463 = vmatpush1.msra.mxu0 0.0
        %464 = vmatprep.subr.mxu0 0.0
        %465 = vmatpush1.msra.mxu0 0.0
        %466 = vmatprep.subr.mxu0 0.0
        %467 = vmatpush1.msra.mxu0 0.0
        %468 = vmatprep.subr.mxu0 0.0
        %469 = vmatpush1.msra.mxu0 0.0
        %470 = vmatprep.subr.mxu0 0.0
        %471 = vmatpush1.msra.mxu0 0.0
        %472 = vmatprep.subr.mxu0 0.0
        %473 = vmatpush1.msra.mxu0 0.0
        %474 = vmatprep.subr.mxu0 0.0
        %475 = vmatpush1.msra.mxu0 0.0
        %476 = vmatprep.subr.mxu0 0.0
        %477 = vmatpush1.msra.mxu0 0.0
        %478 = vmatprep.mubr.f32.mxu0 0.0
        %479 = vmatmul.mubr.f32.gmra.mrb[0].mxu0 %v390
        %v480 = vpop.f32.mrb[0].mxu0
        %v481 = vadd.f32 %v412, %v480
        %v482 = vpop.f32.mrb[0].mxu0
        %483 = vdwg.mxu0
        %vm484 = vcmp.gt.f32.partialorder %v481, 0.0
        %v485 = vmin.f32 %v481, 0.0
        %v486 = vmul.f32 %v485, 1.442695
        %v487 = vpow.pop %v486
        %v488 = vsub.f32 %v487, 1.0
        %v489 = vsel %vm484, %v481, %v488
        %v490 = vld [vmem:[%s6] sm:$0xff]
        %v491 = vld [vmem:[%s6 + $0x8] sm:$0xff]
        %v492 = vld [vmem:[%s6 + $0x10] sm:$0xff]
        %v493 = vld [vmem:[%s6 + $0x18] sm:$0xff]
        %v494 = vld [vmem:[%s6 + $0x20] sm:$0xff]
        %v495 = vld [vmem:[%s6 + $0x28] sm:$0xff]
        %v496 = vld [vmem:[%s6 + $0x30] sm:$0xff]
        %v497 = vld [vmem:[%s6 + $0x38] sm:$0xff]
        %v498 = vld [vmem:[%s6 + $0x40] sm:$0xff]
        %v499 = vld [vmem:[%s6 + $0x48] sm:$0xff]
        %v500 = vld [vmem:[%s6 + $0x50] sm:$0xff]
        %v501 = vld [vmem:[%s6 + $0x58] sm:$0xff]
        %v502 = vld [vmem:[%s6 + $0x60] sm:$0xff]
        %v503 = vld [vmem:[%s6 + $0x68] sm:$0xff]
        %v504 = vld [vmem:[%s6 + $0x70] sm:$0xff]
        %v505 = vld [vmem:[%s6 + $0x78] sm:$0xff]
        %v506 = vld [vmem:[%s7] sm:$0x1]
        %v508 = vlaneseq
        %v509 = vshrl.u32 %v508, 7
        %v510 = vsub.s32 0, %v509
        %v511 = vrot.slane %v506, %v510
        %513 = vmatprep.subr.mxu0 0.0
        %514 = vmatpush1.msra.mxu0 %v490
        %515 = vmatprep.subr.mxu0 0.0
        %516 = vmatpush1.msra.mxu0 %v491
        %517 = vmatprep.subr.mxu0 0.0
        %518 = vmatpush1.msra.mxu0 %v492
        %519 = vmatprep.subr.mxu0 0.0
        %520 = vmatpush1.msra.mxu0 %v493
        %521 = vmatprep.subr.mxu0 0.0
        %522 = vmatpush1.msra.mxu0 %v494
        %523 = vmatprep.subr.mxu0 0.0
        %524 = vmatpush1.msra.mxu0 %v495
        %525 = vmatprep.subr.mxu0 0.0
        %526 = vmatpush1.msra.mxu0 %v496
        %527 = vmatprep.subr.mxu0 0.0
        %528 = vmatpush1.msra.mxu0 %v497
        %529 = vmatprep.subr.mxu0 0.0
        %530 = vmatpush1.msra.mxu0 %v498
        %531 = vmatprep.subr.mxu0 0.0
        %532 = vmatpush1.msra.mxu0 %v499
        %533 = vmatprep.subr.mxu0 0.0
        %534 = vmatpush1.msra.mxu0 %v500
        %535 = vmatprep.subr.mxu0 0.0
        %536 = vmatpush1.msra.mxu0 %v501
        %537 = vmatprep.subr.mxu0 0.0
        %538 = vmatpush1.msra.mxu0 %v502
        %539 = vmatprep.subr.mxu0 0.0
        %540 = vmatpush1.msra.mxu0 %v503
        %541 = vmatprep.subr.mxu0 0.0
        %542 = vmatpush1.msra.mxu0 %v504
        %543 = vmatprep.subr.mxu0 0.0
        %544 = vmatpush1.msra.mxu0 %v505
        %545 = vmatprep.subr.mxu0 0.0
        %546 = vmatpush1.msra.mxu0 0.0
        %547 = vmatprep.subr.mxu0 0.0
        %548 = vmatpush1.msra.mxu0 0.0
        %549 = vmatprep.subr.mxu0 0.0
        %550 = vmatpush1.msra.mxu0 0.0
        %551 = vmatprep.subr.mxu0 0.0
        %552 = vmatpush1.msra.mxu0 0.0
        %553 = vmatprep.subr.mxu0 0.0
        %554 = vmatpush1.msra.mxu0 0.0
        %555 = vmatprep.subr.mxu0 0.0
        %556 = vmatpush1.msra.mxu0 0.0
        %557 = vmatprep.subr.mxu0 0.0
        %558 = vmatpush1.msra.mxu0 0.0
        %559 = vmatprep.subr.mxu0 0.0
        %560 = vmatpush1.msra.mxu0 0.0
        %561 = vmatprep.subr.mxu0 0.0
        %562 = vmatpush1.msra.mxu0 0.0
        %563 = vmatprep.subr.mxu0 0.0
        %564 = vmatpush1.msra.mxu0 0.0
        %565 = vmatprep.subr.mxu0 0.0
        %566 = vmatpush1.msra.mxu0 0.0
        %567 = vmatprep.subr.mxu0 0.0
        %568 = vmatpush1.msra.mxu0 0.0
        %569 = vmatprep.subr.mxu0 0.0
        %570 = vmatpush1.msra.mxu0 0.0
        %571 = vmatprep.subr.mxu0 0.0
        %572 = vmatpush1.msra.mxu0 0.0
        %573 = vmatprep.subr.mxu0 0.0
        %574 = vmatpush1.msra.mxu0 0.0
        %575 = vmatprep.subr.mxu0 0.0
        %576 = vmatpush1.msra.mxu0 0.0
        %577 = vmatprep.mubr.f32.mxu0 0.0
        %578 = vmatmul.mubr.f32.gmra.mrb[0].mxu0 %v489
        %v579 = vpop.f32.mrb[0].mxu0
        %v580 = vadd.f32 %v511, %v579
        %v581 = vpop.f32.mrb[0].mxu0
        %582 = vdwg.mxu0
        %v583 = vxor.u32 %v580, 2147483648
        %v584 = vmul.f32 %v583, 1.442695
        %v585 = vpow.pop %v584
        %v586 = vadd.f32 %v585, 1.0
        %v587 = vrcp.pop %v586
        %v588 = vmul.f32 1.0, %v587
        %v590 = vlaneseq
        %v591 = vshrl.u32 %v590, 7
        %v592 = vsub.s32 0, %v591
        %v593 = vrot.slane %v302, %v592
        %594 = vrot.lane.b32.xlu0 %v593, 116
        %v595 = vpop.permute.xlu0 %594
        %v597 = vmul.f32 %v588, %v595
        %600 = vrot.lane.b32.xlu0 %v597, 8
        %v601 = vpop.permute.xlu0 %600
        %v603 = vadd.f32 %v593, %v601
        %605 = vset.pattern.permute.xlu0 10
        %606 = vperm.xlu0 %605, %v603
        %v607 = vpop.permute.xlu0 %606
        %v609 = vmul.f32 %v593, %v607
        %v610 = vmul.f32 %v609, 1.442695
        %v611 = vpow.pop %v610
        %612 = vset.pattern.permute.xlu0 9
        %613 = vperm.xlu0 %612, %v603
        %v614 = vpop.permute.xlu0 %613
        %v616 = vmul.f32 %v614, %v611
        %v617 = vsub.f32 1.0, %v603
        %618 = vset.pattern.permute.xlu0 8
        %619 = vperm.xlu0 %618, %v603
        %v620 = vpop.permute.xlu0 %619
        %v622 = vmul.f32 %v593, %v620
        %v623 = vmul.f32 %v622, 1.442695
        %v624 = vpow.pop %v623
        %626 = vset.pattern.permute.xlu0 9
        %627 = vperm.xlu0 %626, %v617
        %v628 = vpop.permute.xlu0 %627
        %v630 = vmul.f32 %v628, %v624
        %v631 = vadd.f32 %v616, %v630
        %632 = vset.pattern.permute.xlu0 11
        %633 = vperm.xlu0 %632, %v603
        %v634 = vpop.permute.xlu0 %633
        %v636 = vmul.f32 %v634, %v631
        %638 = vrot.lane.b32.xlu0 %v588, 12
        %v639 = vpop.permute.xlu0 %638
        %v641 = vsel %vm311, %v636, %v603
        %vm642 = vcmask 97280
        %v643 = vsel %vm642, %v641, %v639
        %vm644 = vcmask 130048
        %645 = vst.msk [vmem:[%s296] sm:$0xff] %vm644, %v643
        %s646 = sand.u32 %s203, 1
        %s647 = scalar_lea.sflag [#allocation3], %s646
        %s648 = sand.u32 %s203, 1
        %s649 = smul.addr %s648, 8
        %s650 = scalar_lea.vmem [#allocation2], %s649
        // Predicated region
        $region53: #{tpu_custom_call.1} parent=51 // pred_check
          %p651 = pneg %p213
        $region54: #{tpu_custom_call.1} parent=51 // pred_check_branch
          %653 = sbr.rel (%p651) target = $region56
        $region55: #{tpu_custom_call.1} parent=51 // pred_region
          %s655 = ssub.s32 128, 128
          %656 = vsyncadd %s647, %s655
          %s657 = smul.addr %s22, 128
          %s658 = scalar_lea.hbm %s8, %s657
          %s660 = sshll.u32 %s650, 4
          %s661 = int_to_ptr.vmem [resolvable:$true] %s660
          %663 = dma.vmem_to_hbm [thread:$0]  %s661, 128, %s658, %s647
        $region56: #{tpu_custom_call.1} parent=51 // pred_fallthru
          _
      $region52: #{tpu_custom_call.1} parent=5 // pred_fallthru
        _
      %p664 = scmp.le.s32.totalorder 2, %s17
      // Predicated region
      $region57: #{tpu_custom_call.1} parent=5 // pred_check
        %p665 = pneg %p664
      $region58: #{tpu_custom_call.1} parent=5 // pred_check_branch
        %667 = sbr.rel (%p665) target = $region60
      $region59: #{tpu_custom_call.1} parent=5 // pred_region
        %s668 = ssub.s32 %s17, 2
        // Predicated region
        $region61: #{tpu_custom_call.1} parent=59 // pred_check
          %p669 = pneg %p219
        $region62: #{tpu_custom_call.1} parent=59 // pred_check_branch
          %671 = sbr.rel (%p669) target = $region64
        $region63: #{tpu_custom_call.1} parent=59 // pred_region
          %s672 = sand.u32 %s204, 1
          %s673 = scalar_lea.sflag [#allocation3], %s672
          %s674 = sand.u32 %s204, 1
          %s675 = smul.addr %s674, 8
          %s676 = scalar_lea.vmem [#allocation2], %s675
          %677 = dma.done %s673, 128
        $region64: #{tpu_custom_call.1} parent=59 // pred_fallthru
          _
      $region60: #{tpu_custom_call.1} parent=5 // pred_fallthru
        _
    $region6: #{tpu_custom_call.1} parent=1 // loop_footer
      %s21 = sadd.s32 1, %s17
    $region7: #{tpu_custom_call.1} parent=1 // loop_footer_branch
      %16 = sbr.rel target = $region3
    $region8: #{tpu_custom_call.1} parent=1 // loop_exit
      _
    %678 = vsyncpa [#allocation3], 1
    %s679 = scalar_lea.sflag [#allocation3], 1
    %680 = vsyncpa %s679, 1

</llo_original>
